<compile_context>
chip_gen: v7x
topology: tpu7x:2x2x1
jax: 0.10.0
libtpu: 0.0.40
codegen_flags: <defaults>
</compile_context>

<pallas_src>
import functools
import math

import jax
import jax.numpy as jnp
from jax.experimental import pallas as pl
from jax.experimental.pallas import tpu as pltpu


def _resnet_block_kernel(alpha_ref,        # SMEM (2,)   PReLU alphas
                         x_ref,            # (pool, Cin, tile_m)  f32
                         wa_ref,           # (Cout or 2*Cout, Cin) bf16: bn1-folded conv1 [+ skip]
                         b1_ref,           # (Cout, 1) f32  BN1 shift
                         w2_ref,           # (Cout, Cout) bf16: bn2-folded conv2
                         b2_ref,           # (Cout, 1) f32  BN2 shift
                         o_ref,            # (Cout, tile_m) f32
                         *, pool, cout, identity_skip):
    a1 = alpha_ref[0]
    a2 = alpha_ref[1]
    wa = wa_ref[...]
    w2 = w2_ref[...]
    b1 = b1_ref[...]
    b2 = b2_ref[...]

    acc = None
    # Static unroll over the (small) pool factor.  Each y_j is the full
    # pre-pool activation at time offset j within every pooling window; the
    # max over j is exactly MaxPool1d(pool) with kernel == stride == pool.
    for j in range(pool):
        xj = x_ref[j]                                             # (Cin, tile_m) f32
        # Conv1d(k=1, bias=False) == channel matmul on the MXU (bf16 in, f32 acc).
        z = jnp.dot(wa, xj.astype(jnp.bfloat16),
                    preferred_element_type=jnp.float32)           # (CA, tile_m)
        if identity_skip:
            h = z + b1
            skip = xj
        else:
            h = z[:cout] + b1
            skip = z[cout:]
        # PReLU (single shared alpha).
        h = jnp.where(h >= 0.0, h, a1 * h)
        h = jnp.dot(w2, h.astype(jnp.bfloat16),
                    preferred_element_type=jnp.float32) + b2      # (Cout, tile_m)
        y = h + skip
        y = jnp.where(y >= 0.0, y, a2 * y)
        acc = y if acc is None else jnp.maximum(acc, y)

    o_ref[...] = acc


def resnet_block_pallas(x, packed, *, pool=3, max_tile_m=1024):
    """x: (B, Cin, T) f32.  Returns (B, Cout, T // pool) f32."""
    B, Cin, T = x.shape
    Cout = packed["w2"].shape[0]
    identity_skip = bool(packed["identity_skip"])
    Tout = T // pool
    M = B * Tout

    # Re-layout so pooling never needs strided access in-kernel:
    #   xr[j, c, b*Tout + w] = x[b, c, w*pool + j]
    xr = (x[:, :, : Tout * pool]
          .reshape(B, Cin, Tout, pool)
          .transpose(3, 1, 0, 2)
          .reshape(pool, Cin, M))

    if M <= max_tile_m:
        tile_m, m_pad = M, M
    else:
        tile_m = max_tile_m                      # multiple of 128 -> lane-dense stores
        m_pad = -(-M // tile_m) * tile_m
        if m_pad != M:
            # Padded lanes produce garbage columns that are sliced off below.
            xr = jnp.pad(xr, ((0, 0), (0, 0), (0, m_pad - M)))

    grid_spec = pltpu.PrefetchScalarGridSpec(
        num_scalar_prefetch=0,
        grid=(m_pad // tile_m,),
        in_specs=[
            pl.BlockSpec(memory_space=pltpu.MemorySpace.SMEM),         # alphas (2,)
            pl.BlockSpec((pool, Cin, tile_m), lambda m: (0, 0, m)),    # x tiles
            pl.BlockSpec(tuple(packed["wa"].shape), lambda m: (0, 0)), # fused conv1(+skip)
            pl.BlockSpec((Cout, 1), lambda m: (0, 0)),                 # bn1 shift
            pl.BlockSpec((Cout, Cout), lambda m: (0, 0)),              # conv2 (bn2-folded)
            pl.BlockSpec((Cout, 1), lambda m: (0, 0)),                 # bn2 shift
        ],
        out_specs=pl.BlockSpec((Cout, tile_m), lambda m: (0, m)),
    )

    out = pl.pallas_call(
        functools.partial(_resnet_block_kernel, pool=pool, cout=Cout,
                          identity_skip=identity_skip),
        out_shape=jax.ShapeDtypeStruct((Cout, m_pad), jnp.float32),
        grid_spec=grid_spec,
        compiler_params=pltpu.CompilerParams(
            dimension_semantics=("parallel",),          # shards across v7x's 2 TCs
            vmem_limit_bytes=32 * 1024 * 1024,          # ample for tile_m<=1024; fits v7x 64 MiB
        ),
    )(packed["alphas"], xr, packed["wa"], packed["b1"], packed["w2"], packed["b2"])

    # (Cout, B*Tout) -> (B, Cout, Tout)
    return out[:, :M].reshape(Cout, B, Tout).transpose(1, 0, 2)


def init_params(key, in_channels, out_channels):
    """PyTorch-style raw parameters (fresh-module init)."""
    k1, k2, k3 = jax.random.split(key, 3)

    def xavier_uniform(k, fan_out, fan_in):
        bound = math.sqrt(6.0 / (fan_in + fan_out))
        return jax.random.uniform(k, (fan_out, fan_in), jnp.float32, -bound, bound)

    ones = jnp.ones((out_channels,), jnp.float32)
    zeros = jnp.zeros((out_channels,), jnp.float32)
    p = dict(
        w1=xavier_uniform(k1, out_channels, in_channels),
        w2=xavier_uniform(k2, out_channels, out_channels),
        gamma1=ones, beta1=zeros, mean1=zeros, var1=ones,
        gamma2=ones, beta2=zeros, mean2=zeros, var2=ones,
        alphas=jnp.array([0.25, 0.25], dtype=jnp.float32),   # two PReLU modules
    )
    if in_channels != out_channels:
        p["wskip"] = xavier_uniform(k3, out_channels, in_channels)
    return p


def prepare_params(raw, in_channels, out_channels, eps=1e-5):
    """Fold inference-mode BN into the conv weights; fuse the skip conv; cast to bf16."""
    s1 = raw["gamma1"] / jnp.sqrt(raw["var1"] + eps)
    b1 = raw["beta1"] - raw["mean1"] * s1
    s2 = raw["gamma2"] / jnp.sqrt(raw["var2"] + eps)
    b2 = raw["beta2"] - raw["mean2"] * s2
    w1f = raw["w1"] * s1[:, None]           # exact f32 fold
    w2f = raw["w2"] * s2[:, None]
    identity_skip = in_channels == out_channels
    wa = w1f if identity_skip else jnp.concatenate([w1f, raw["wskip"]], axis=0)
    return dict(
        wa=wa.astype(jnp.bfloat16),
        w2=w2f.astype(jnp.bfloat16),
        b1=b1.reshape(-1, 1).astype(jnp.float32),
        b2=b2.reshape(-1, 1).astype(jnp.float32),
        alphas=raw["alphas"].astype(jnp.float32),
        identity_skip=identity_skip,
    )


def resnet_block_reference(x, packed, *, pool=3):
    """Plain-JAX reference with the same (inference-BN, bf16-matmul) semantics."""
    a1, a2 = packed["alphas"][0], packed["alphas"][1]
    cout = packed["w2"].shape[0]
    z = jnp.einsum("oc,bct->bot", packed["wa"], x.astype(jnp.bfloat16),
                   preferred_element_type=jnp.float32)
    if packed["identity_skip"]:
        h = z + packed["b1"][None]
        skip = x
    else:
        h = z[:, :cout] + packed["b1"][None]
        skip = z[:, cout:]
    h = jnp.where(h >= 0, h, a1 * h)
    h = jnp.einsum("oc,bct->bot", packed["w2"], h.astype(jnp.bfloat16),
                   preferred_element_type=jnp.float32) + packed["b2"][None]
    y = h + skip
    y = jnp.where(y >= 0, y, a2 * y)
    B, C, T = y.shape
    tout = T // pool
    y = y[:, :, : tout * pool].reshape(B, C, tout, pool)
    return jnp.max(y, axis=-1)


if __name__ == "__main__":
    B, T, POOL = 2, 96, 3
    key = jax.random.PRNGKey(0)
    kx, kp1, kp2 = jax.random.split(key, 3)

    # Case 1: in_channels != out_channels -> fused (conv1 | skip-conv) matmul.
    Cin, Cout = 8, 16
    x = jax.random.normal(kx, (B, Cin, T), dtype=jnp.float32)
    packed = prepare_params(init_params(kp1, Cin, Cout), Cin, Cout)
    out = jax.block_until_ready(resnet_block_pallas(x, packed, pool=POOL))
    ref = resnet_block_reference(x, packed, pool=POOL)
    assert out.shape == (B, Cout, T // POOL), out.shape
    assert jnp.allclose(out, ref, atol=2e-3, rtol=2e-3), \
        float(jnp.max(jnp.abs(out - ref)))

    # Case 2: in_channels == out_channels -> identity skip (no skip matmul).
    Cin2 = Cout2 = 16
    x2 = jax.random.normal(kx, (B, Cin2, T), dtype=jnp.float32)
    packed2 = prepare_params(init_params(kp2, Cin2, Cout2), Cin2, Cout2)
    out2 = jax.block_until_ready(resnet_block_pallas(x2, packed2, pool=POOL))
    ref2 = resnet_block_reference(x2, packed2, pool=POOL)
    assert out2.shape == (B, Cout2, T // POOL), out2.shape
    assert jnp.allclose(out2, ref2, atol=2e-3, rtol=2e-3), \
        float(jnp.max(jnp.abs(out2 - ref2)))

    print("KERNEL_OK")
</pallas_src>

<mosaic_0001>
module attributes {stable_mosaic.version = 11 : i64} {
  func.func @_resnet_block_kernel(%arg0: i32, %arg1: memref<2xf32, #tpu.memory_space<smem>>, %arg2: memref<3x8x64xf32, #tpu.memory_space<vmem>>, %arg3: memref<32x8xbf16, #tpu.memory_space<vmem>>, %arg4: memref<16x1xf32, #tpu.memory_space<vmem>>, %arg5: memref<16x16xbf16, #tpu.memory_space<vmem>>, %arg6: memref<16x1xf32, #tpu.memory_space<vmem>>, %arg7: memref<16x64xf32, #tpu.memory_space<vmem>>) attributes {dimension_semantics = [#tpu.dimension_semantics<parallel>], iteration_bounds = array<i64: 1>, scalar_prefetch = 0 : i64, scratch_operands = 0 : i64, tpu.core_type = #tpu.core_type<tc>, window_params = [{transform_indices = @transform_0, window_bounds = array<i64: 2>}, {transform_indices = @transform_1, window_bounds = array<i64: 3, 8, 64>}, {pipeline_mode = #tpu.pipeline_mode<synchronous>, transform_indices = @transform_2, window_bounds = array<i64: 32, 8>}, {pipeline_mode = #tpu.pipeline_mode<synchronous>, transform_indices = @transform_3, window_bounds = array<i64: 16, 1>}, {pipeline_mode = #tpu.pipeline_mode<synchronous>, transform_indices = @transform_4, window_bounds = array<i64: 16, 16>}, {pipeline_mode = #tpu.pipeline_mode<synchronous>, transform_indices = @transform_5, window_bounds = array<i64: 16, 1>}, {transform_indices = @transform_6, window_bounds = array<i64: 16, 64>}]} {
    %c0 = arith.constant 0 : index
    %0 = memref.load %arg1[%c0] : memref<2xf32, #tpu.memory_space<smem>>
    %c1 = arith.constant 1 : index
    %1 = memref.load %arg1[%c1] : memref<2xf32, #tpu.memory_space<smem>>
    %c0_0 = arith.constant 0 : index
    %c0_1 = arith.constant 0 : index
    %2 = vector.load %arg3[%c0_0, %c0_1] : memref<32x8xbf16, #tpu.memory_space<vmem>>, vector<32x8xbf16>
    %c0_2 = arith.constant 0 : index
    %c0_3 = arith.constant 0 : index
    %3 = vector.load %arg5[%c0_2, %c0_3] : memref<16x16xbf16, #tpu.memory_space<vmem>>, vector<16x16xbf16>
    %c0_4 = arith.constant 0 : index
    %c0_5 = arith.constant 0 : index
    %4 = vector.load %arg4[%c0_4, %c0_5] : memref<16x1xf32, #tpu.memory_space<vmem>>, vector<16x1xf32>
    %c0_6 = arith.constant 0 : index
    %c0_7 = arith.constant 0 : index
    %5 = vector.load %arg6[%c0_6, %c0_7] : memref<16x1xf32, #tpu.memory_space<vmem>>, vector<16x1xf32>
    %c0_8 = arith.constant 0 : index
    %c0_9 = arith.constant 0 : index
    %c0_10 = arith.constant 0 : index
    %6 = vector.load %arg2[%c0_8, %c0_9, %c0_10] : memref<3x8x64xf32, #tpu.memory_space<vmem>>, vector<1x8x64xf32>
    %7 = vector.shape_cast %6 : vector<1x8x64xf32> to vector<8x64xf32>
    %8 = arith.truncf %7 : vector<8x64xf32> to vector<8x64xbf16>
    %cst = arith.constant dense<0.000000e+00> : vector<32x64xf32>
    %9 = tpu.matmul %2, %8, %cst {dimension_numbers = #tpu.dot_dimension_numbers<[1], [0], [0], [1], [0, 0, 1, 1], [], []>} : vector<32x8xbf16>, vector<8x64xbf16>, vector<32x64xf32> -> vector<32x64xf32>
    %10 = vector.extract_strided_slice %9 {offsets = [0, 0], sizes = [16, 64], strides = [1, 1]} : vector<32x64xf32> to vector<16x64xf32>
    %11 = vector.broadcast %4 : vector<16x1xf32> to vector<16x64xf32>
    %12 = arith.addf %10, %11 : vector<16x64xf32>
    %13 = vector.extract_strided_slice %9 {offsets = [16, 0], sizes = [16, 64], strides = [1, 1]} : vector<32x64xf32> to vector<16x64xf32>
    %cst_11 = arith.constant 0.000000e+00 : f32
    %14 = vector.broadcast %cst_11 : f32 to vector<16x64xf32>
    %15 = arith.cmpf oge, %12, %14 : vector<16x64xf32>
    %16 = vector.broadcast %0 : f32 to vector<16x64xf32>
    %17 = arith.mulf %16, %12 : vector<16x64xf32>
    %18 = arith.select %15, %12, %17 : vector<16x64xi1>, vector<16x64xf32>
    %19 = arith.truncf %18 : vector<16x64xf32> to vector<16x64xbf16>
    %cst_12 = arith.constant dense<0.000000e+00> : vector<16x64xf32>
    %20 = tpu.matmul %3, %19, %cst_12 {dimension_numbers = #tpu.dot_dimension_numbers<[1], [0], [0], [1], [0, 0, 1, 1], [], []>} : vector<16x16xbf16>, vector<16x64xbf16>, vector<16x64xf32> -> vector<16x64xf32>
    %21 = vector.broadcast %5 : vector<16x1xf32> to vector<16x64xf32>
    %22 = arith.addf %20, %21 : vector<16x64xf32>
    %23 = arith.addf %22, %13 : vector<16x64xf32>
    %cst_13 = arith.constant 0.000000e+00 : f32
    %24 = vector.broadcast %cst_13 : f32 to vector<16x64xf32>
    %25 = arith.cmpf oge, %23, %24 : vector<16x64xf32>
    %26 = vector.broadcast %1 : f32 to vector<16x64xf32>
    %27 = arith.mulf %26, %23 : vector<16x64xf32>
    %28 = arith.select %25, %23, %27 : vector<16x64xi1>, vector<16x64xf32>
    %c1_14 = arith.constant 1 : index
    %c0_15 = arith.constant 0 : index
    %c0_16 = arith.constant 0 : index
    %29 = vector.load %arg2[%c1_14, %c0_15, %c0_16] : memref<3x8x64xf32, #tpu.memory_space<vmem>>, vector<1x8x64xf32>
    %30 = vector.shape_cast %29 : vector<1x8x64xf32> to vector<8x64xf32>
    %31 = arith.truncf %30 : vector<8x64xf32> to vector<8x64xbf16>
    %cst_17 = arith.constant dense<0.000000e+00> : vector<32x64xf32>
    %32 = tpu.matmul %2, %31, %cst_17 {dimension_numbers = #tpu.dot_dimension_numbers<[1], [0], [0], [1], [0, 0, 1, 1], [], []>} : vector<32x8xbf16>, vector<8x64xbf16>, vector<32x64xf32> -> vector<32x64xf32>
    %33 = vector.extract_strided_slice %32 {offsets = [0, 0], sizes = [16, 64], strides = [1, 1]} : vector<32x64xf32> to vector<16x64xf32>
    %34 = vector.broadcast %4 : vector<16x1xf32> to vector<16x64xf32>
    %35 = arith.addf %33, %34 : vector<16x64xf32>
    %36 = vector.extract_strided_slice %32 {offsets = [16, 0], sizes = [16, 64], strides = [1, 1]} : vector<32x64xf32> to vector<16x64xf32>
    %cst_18 = arith.constant 0.000000e+00 : f32
    %37 = vector.broadcast %cst_18 : f32 to vector<16x64xf32>
    %38 = arith.cmpf oge, %35, %37 : vector<16x64xf32>
    %39 = vector.broadcast %0 : f32 to vector<16x64xf32>
    %40 = arith.mulf %39, %35 : vector<16x64xf32>
    %41 = arith.select %38, %35, %40 : vector<16x64xi1>, vector<16x64xf32>
    %42 = arith.truncf %41 : vector<16x64xf32> to vector<16x64xbf16>
    %cst_19 = arith.constant dense<0.000000e+00> : vector<16x64xf32>
    %43 = tpu.matmul %3, %42, %cst_19 {dimension_numbers = #tpu.dot_dimension_numbers<[1], [0], [0], [1], [0, 0, 1, 1], [], []>} : vector<16x16xbf16>, vector<16x64xbf16>, vector<16x64xf32> -> vector<16x64xf32>
    %44 = vector.broadcast %5 : vector<16x1xf32> to vector<16x64xf32>
    %45 = arith.addf %43, %44 : vector<16x64xf32>
    %46 = arith.addf %45, %36 : vector<16x64xf32>
    %cst_20 = arith.constant 0.000000e+00 : f32
    %47 = vector.broadcast %cst_20 : f32 to vector<16x64xf32>
    %48 = arith.cmpf oge, %46, %47 : vector<16x64xf32>
    %49 = vector.broadcast %1 : f32 to vector<16x64xf32>
    %50 = arith.mulf %49, %46 : vector<16x64xf32>
    %51 = arith.select %48, %46, %50 : vector<16x64xi1>, vector<16x64xf32>
    %52 = arith.maximumf %28, %51 : vector<16x64xf32>
    %c2 = arith.constant 2 : index
    %c0_21 = arith.constant 0 : index
    %c0_22 = arith.constant 0 : index
    %53 = vector.load %arg2[%c2, %c0_21, %c0_22] : memref<3x8x64xf32, #tpu.memory_space<vmem>>, vector<1x8x64xf32>
    %54 = vector.shape_cast %53 : vector<1x8x64xf32> to vector<8x64xf32>
    %55 = arith.truncf %54 : vector<8x64xf32> to vector<8x64xbf16>
    %cst_23 = arith.constant dense<0.000000e+00> : vector<32x64xf32>
    %56 = tpu.matmul %2, %55, %cst_23 {dimension_numbers = #tpu.dot_dimension_numbers<[1], [0], [0], [1], [0, 0, 1, 1], [], []>} : vector<32x8xbf16>, vector<8x64xbf16>, vector<32x64xf32> -> vector<32x64xf32>
    %57 = vector.extract_strided_slice %56 {offsets = [0, 0], sizes = [16, 64], strides = [1, 1]} : vector<32x64xf32> to vector<16x64xf32>
    %58 = vector.broadcast %4 : vector<16x1xf32> to vector<16x64xf32>
    %59 = arith.addf %57, %58 : vector<16x64xf32>
    %60 = vector.extract_strided_slice %56 {offsets = [16, 0], sizes = [16, 64], strides = [1, 1]} : vector<32x64xf32> to vector<16x64xf32>
    %cst_24 = arith.constant 0.000000e+00 : f32
    %61 = vector.broadcast %cst_24 : f32 to vector<16x64xf32>
    %62 = arith.cmpf oge, %59, %61 : vector<16x64xf32>
    %63 = vector.broadcast %0 : f32 to vector<16x64xf32>
    %64 = arith.mulf %63, %59 : vector<16x64xf32>
    %65 = arith.select %62, %59, %64 : vector<16x64xi1>, vector<16x64xf32>
    %66 = arith.truncf %65 : vector<16x64xf32> to vector<16x64xbf16>
    %cst_25 = arith.constant dense<0.000000e+00> : vector<16x64xf32>
    %67 = tpu.matmul %3, %66, %cst_25 {dimension_numbers = #tpu.dot_dimension_numbers<[1], [0], [0], [1], [0, 0, 1, 1], [], []>} : vector<16x16xbf16>, vector<16x64xbf16>, vector<16x64xf32> -> vector<16x64xf32>
    %68 = vector.broadcast %5 : vector<16x1xf32> to vector<16x64xf32>
    %69 = arith.addf %67, %68 : vector<16x64xf32>
    %70 = arith.addf %69, %60 : vector<16x64xf32>
    %cst_26 = arith.constant 0.000000e+00 : f32
    %71 = vector.broadcast %cst_26 : f32 to vector<16x64xf32>
    %72 = arith.cmpf oge, %70, %71 : vector<16x64xf32>
    %73 = vector.broadcast %1 : f32 to vector<16x64xf32>
    %74 = arith.mulf %73, %70 : vector<16x64xf32>
    %75 = arith.select %72, %70, %74 : vector<16x64xi1>, vector<16x64xf32>
    %76 = arith.maximumf %52, %75 : vector<16x64xf32>
    %c0_27 = arith.constant 0 : index
    %c0_28 = arith.constant 0 : index
    %77 = vector.load %arg7[%c0_27, %c0_28] : memref<16x64xf32, #tpu.memory_space<vmem>>, vector<16x64xf32>
    tpu.vector_store %arg7[%c0_27, %c0_28], %76 {strides = array<i32>} : memref<16x64xf32, #tpu.memory_space<vmem>>, vector<16x64xf32>,
    return
  }
  func.func @transform_0(%arg0: i32) -> i32 {
    %c0_i32 = arith.constant 0 : i32
    %c0_i32_0 = arith.constant 0 : i32
    return %c0_i32 : i32
  }
  func.func @transform_1(%arg0: i32) -> (i32, i32, i32) {
    %c0_i32 = arith.constant 0 : i32
    %c0_i32_0 = arith.constant 0 : i32
    %c0_i32_1 = arith.constant 0 : i32
    return %c0_i32, %c0_i32_0, %arg0 : i32, i32, i32
  }
  func.func @transform_2(%arg0: i32) -> (i32, i32) {
    %c0_i32 = arith.constant 0 : i32
    %c0_i32_0 = arith.constant 0 : i32
    %c0_i32_1 = arith.constant 0 : i32
    return %c0_i32, %c0_i32_0 : i32, i32
  }
  func.func @transform_3(%arg0: i32) -> (i32, i32) {
    %c0_i32 = arith.constant 0 : i32
    %c0_i32_0 = arith.constant 0 : i32
    %c0_i32_1 = arith.constant 0 : i32
    return %c0_i32, %c0_i32_0 : i32, i32
  }
  func.func @transform_4(%arg0: i32) -> (i32, i32) {
    %c0_i32 = arith.constant 0 : i32
    %c0_i32_0 = arith.constant 0 : i32
    %c0_i32_1 = arith.constant 0 : i32
    return %c0_i32, %c0_i32_0 : i32, i32
  }
  func.func @transform_5(%arg0: i32) -> (i32, i32) {
    %c0_i32 = arith.constant 0 : i32
    %c0_i32_0 = arith.constant 0 : i32
    %c0_i32_1 = arith.constant 0 : i32
    return %c0_i32, %c0_i32_0 : i32, i32
  }
  func.func @transform_6(%arg0: i32) -> (i32, i32) {
    %c0_i32 = arith.constant 0 : i32
    %c0_i32_0 = arith.constant 0 : i32
    return %c0_i32, %arg0 : i32, i32
  }
}

</mosaic_0001>

<llo_original>
// kernel: tpu_custom_call.1
$region0: #{tpu_custom_call.1}
  #allocation0 [shape = 'u32[]', space=smem, size = 0x4, offset = 0x4, fixed_abs, tag = 'smem constant byte address 0x4 - core index']
  #allocation1 [shape = 'u32[144,128]{1,0:T(1,128)}', space=vmem, size = 0x12000, scoped, tag = 'internal scratch']
  %s0 = inlined_call_operand.vmem [shape: f32[2], index: 0, kind: input, shape index: {}]
  %s1 = inlined_call_operand.vmem [shape: f32[3,8,64], index: 1, kind: input, shape index: {}]
  %s2 = inlined_call_operand.vmem [shape: bf16[32,8], index: 2, kind: input, shape index: {}]
  %s3 = inlined_call_operand.vmem [shape: f32[16,1], index: 3, kind: input, shape index: {}]
  %s4 = inlined_call_operand.vmem [shape: bf16[16,16], index: 4, kind: input, shape index: {}]
  %s5 = inlined_call_operand.vmem [shape: f32[16,1], index: 5, kind: input, shape index: {}]
  %s6 = inlined_call_operand.hbm [shape: f32[16,64], index: 6, kind: output, shape index: {}]
  %s7 = sld [smem:[#allocation0]]
  $region38: #{tpu_custom_call.1} parent=0
    _
  %s9 = ssub.s32 1, %s7
  %s10 = scalar_select 0, %s9, %s7
  $region1: #{tpu_custom_call.1} parent=0
    #allocation2 [shape = 'u8[512]{0}', space=smem, size = 0x200, scoped, tag = 'input window, operand 0, single buffered']
    #allocation3 [shape = 's32[1]{0}', space=sflag, size = 0x4, scoped, tag = 'scoped memory for tpu_custom_call.1']
    #allocation4 [shape = 's32[1]{0}', space=sflag, size = 0x4, scoped, tag = 'scoped memory for tpu_custom_call.1']
    #allocation5 [shape = 'u8[8192]{0}', space=vmem, size = 0x2000, scoped, tag = 'output window, operand 0, single buffered']
    %11 = vsyncpa [#allocation4], 0
    %12 = vsyncpa [#allocation3], 0
    // Predicated region
    $region2: #{tpu_custom_call.1} parent=1 // pred_check
      _
    $region3: #{tpu_custom_call.1} parent=1 // pred_check_branch
      %14 = sbr.rel (0) target = $region5
    $region4: #{tpu_custom_call.1} parent=1 // pred_region
      %s16 = ssub.s32 16, 16
      %17 = vsyncadd [#allocation4], %s16
      %s19 = sshll.u32 %s0, 4
      %s20 = int_to_ptr.vmem [resolvable:$true] %s19
      %22 = dma.vmem_to_smem %s20, 16, [#allocation2], [#allocation4]
    $region5: #{tpu_custom_call.1} parent=1 // pred_fallthru
      _
    // Predicated region
    $region6: #{tpu_custom_call.1} parent=1 // pred_check
      _
    $region7: #{tpu_custom_call.1} parent=1 // pred_check_branch
      %24 = sbr.rel (0) target = $region9
    $region8: #{tpu_custom_call.1} parent=1 // pred_region
      _
    $region9: #{tpu_custom_call.1} parent=1 // pred_fallthru
      _
    // Predicated region
    $region10: #{tpu_custom_call.1} parent=1 // pred_check
      _
    $region11: #{tpu_custom_call.1} parent=1 // pred_check_branch
      %26 = sbr.rel (0) target = $region13
    $region12: #{tpu_custom_call.1} parent=1 // pred_region
      _
    $region13: #{tpu_custom_call.1} parent=1 // pred_fallthru
      _
    // Predicated region
    $region14: #{tpu_custom_call.1} parent=1 // pred_check
      _
    $region15: #{tpu_custom_call.1} parent=1 // pred_check_branch
      %28 = sbr.rel (0) target = $region17
    $region16: #{tpu_custom_call.1} parent=1 // pred_region
      _
    $region17: #{tpu_custom_call.1} parent=1 // pred_fallthru
      _
    // Predicated region
    $region18: #{tpu_custom_call.1} parent=1 // pred_check
      _
    $region19: #{tpu_custom_call.1} parent=1 // pred_check_branch
      %30 = sbr.rel (0) target = $region21
    $region20: #{tpu_custom_call.1} parent=1 // pred_region
      _
    $region21: #{tpu_custom_call.1} parent=1 // pred_fallthru
      _
    // Predicated region
    $region22: #{tpu_custom_call.1} parent=1 // pred_check
      _
    $region23: #{tpu_custom_call.1} parent=1 // pred_check_branch
      %32 = sbr.rel (0) target = $region25
    $region24: #{tpu_custom_call.1} parent=1 // pred_region
      _
    $region25: #{tpu_custom_call.1} parent=1 // pred_fallthru
      _
    // Predicated region
    $region26: #{tpu_custom_call.1} parent=1 // pred_check
      _
    $region27: #{tpu_custom_call.1} parent=1 // pred_check_branch
      %34 = sbr.rel (0) target = $region29
    $region28: #{tpu_custom_call.1} parent=1 // pred_region
      %35 = dma.done [#allocation4], 16
    $region29: #{tpu_custom_call.1} parent=1 // pred_fallthru
      _
    %36 = sfence
    %s38 = sld [smem:[#allocation2]]
    %s39 = sld [smem:[#allocation2 + $0x1]]
    %v40 = vld [vmem:[%s2] sm:$0xf]
    %v41 = vld [vmem:[%s2 + $0x4] sm:$0xf]
    %v42 = vld [vmem:[%s2 + $0x8] sm:$0xf]
    %v43 = vld [vmem:[%s2 + $0xc] sm:$0xf]
    %v44 = vld [vmem:[%s4] sm:$0xf]
    %v45 = vld [vmem:[%s4 + $0x4] sm:$0xf]
    %v46 = vld [vmem:[%s3] sm:$0xff]
    %v47 = vld [vmem:[%s3 + $0x8] sm:$0xff]
    %v48 = vld [vmem:[%s5] sm:$0xff]
    %v49 = vld [vmem:[%s5 + $0x8] sm:$0xff]
    %v50 = vld [vmem:[%s1] sm:$0xff]
    %v51 = vpack.c.bf16 %v50, %v50
    %v56 = vunpack.c.l.b16 %v40
    %v57 = vunpack.c.l.b16 %v41
    %v58 = vunpack.c.l.b16 %v42
    %v59 = vunpack.c.l.b16 %v43
    %v60 = vpack.c.b16 %v57, %v56
    %v61 = vpack.c.b16 %v59, %v58
    %vm62 = vcmask 64512
    %v64 = vsel %vm62, %v60, 0
    %v67 = vsel %vm62, %v61, 0
    %vm69 = vcmask 1043456
    %v71 = vsel %vm69, %v51, 0
    %73 = vmatprep.subr.bf16.mxu0 0
    %74 = vmatpush1.bf16.msra.mxu0 %v71
    %75 = vmatprep.subr.bf16.mxu0 0
    %76 = vmatpush1.bf16.msra.mxu0 0
    %77 = vmatprep.subr.bf16.mxu0 0
    %78 = vmatpush1.bf16.msra.mxu0 0
    %79 = vmatprep.subr.bf16.mxu0 0
    %80 = vmatpush1.bf16.msra.mxu0 0
    %81 = vmatprep.subr.bf16.mxu0 0
    %82 = vmatpush1.bf16.msra.mxu0 0
    %83 = vmatprep.subr.bf16.mxu0 0
    %84 = vmatpush1.bf16.msra.mxu0 0
    %85 = vmatprep.subr.bf16.mxu0 0
    %86 = vmatpush1.bf16.msra.mxu0 0
    %87 = vmatprep.subr.bf16.mxu0 0
    %88 = vmatpush1.bf16.msra.mxu0 0
    %89 = vmatprep.subr.bf16.mxu0 0
    %90 = vmatpush1.bf16.msra.mxu0 0
    %91 = vmatprep.subr.bf16.mxu0 0
    %92 = vmatpush1.bf16.msra.mxu0 0
    %93 = vmatprep.subr.bf16.mxu0 0
    %94 = vmatpush1.bf16.msra.mxu0 0
    %95 = vmatprep.subr.bf16.mxu0 0
    %96 = vmatpush1.bf16.msra.mxu0 0
    %97 = vmatprep.subr.bf16.mxu0 0
    %98 = vmatpush1.bf16.msra.mxu0 0
    %99 = vmatprep.subr.bf16.mxu0 0
    %100 = vmatpush1.bf16.msra.mxu0 0
    %101 = vmatprep.subr.bf16.mxu0 0
    %102 = vmatpush1.bf16.msra.mxu0 0
    %103 = vmatprep.subr.bf16.mxu0 0
    %104 = vmatpush1.bf16.msra.mxu0 0
    %105 = vmatprep.mubr.bf16.mxu0 0
    %106 = vmatmul.mubr.bf16.gmra.mrb[0].mxu0 %v64
    %v107 = vpop.f32.mrb[0].mxu0
    %v108 = vadd.f32 0.0, %v107
    %v109 = vpop.f32.mrb[0].mxu0
    %v110 = vpop.f32.mrb[0].mxu0
    %v111 = vadd.f32 0.0, %v110
    %v112 = vpop.f32.mrb[0].mxu0
    %113 = vmatprep.mubr.bf16.mxu0 0
    %114 = vmatmul.mubr.bf16.gmra.mrb[0].mxu0 %v67
    %v115 = vpop.f32.mrb[0].mxu0
    %v116 = vadd.f32 0.0, %v115
    %v117 = vpop.f32.mrb[0].mxu0
    %v118 = vpop.f32.mrb[0].mxu0
    %v119 = vadd.f32 0.0, %v118
    %v120 = vpop.f32.mrb[0].mxu0
    %121 = vdwg.mxu0
    %123 = vset.pattern.permute.xlu0 0
    %124 = vperm.xlu0 %123, %v46
    %v125 = vpop.permute.xlu0 %124
    %128 = vset.pattern.permute.xlu0 0
    %129 = vperm.xlu0 %128, %v47
    %v130 = vpop.permute.xlu0 %129
    %v132 = vadd.f32 %v108, %v125
    %v133 = vadd.f32 %v111, %v130
    %vm134 = vcmp.ge.f32.partialorder %v132, 0.0
    %vm135 = vcmp.ge.f32.partialorder %v133, 0.0
    %v136 = vstv %s38
    %v137 = vmul.f32 %v136, %v132
    %v138 = vmul.f32 %v136, %v133
    %v139 = vsel %vm134, %v132, %v137
    %v140 = vsel %vm135, %v133, %v138
    %v141 = vpack.c.bf16 %v140, %v139
    %143 = vset.pattern.permute.xlu0 0
    %144 = vperm.xlu0 %143, %v48
    %v145 = vpop.permute.xlu0 %144
    %148 = vset.pattern.permute.xlu0 0
    %149 = vperm.xlu0 %148, %v49
    %v150 = vpop.permute.xlu0 %149
    %v154 = vunpack.c.l.b16 %v44
    %v155 = vunpack.c.l.b16 %v45
    %v156 = vpack.c.b16 %v155, %v154
    %vm157 = vcmask 130048
    %v159 = vsel %vm157, %v156, 0
    %161 = vmatprep.subr.bf16.mxu0 0
    %162 = vmatpush1.bf16.msra.mxu0 %v141
    %163 = vmatprep.subr.bf16.mxu0 0
    %164 = vmatpush1.bf16.msra.mxu0 0
    %165 = vmatprep.subr.bf16.mxu0 0
    %166 = vmatpush1.bf16.msra.mxu0 0
    %167 = vmatprep.subr.bf16.mxu0 0
    %168 = vmatpush1.bf16.msra.mxu0 0
    %169 = vmatprep.subr.bf16.mxu0 0
    %170 = vmatpush1.bf16.msra.mxu0 0
    %171 = vmatprep.subr.bf16.mxu0 0
    %172 = vmatpush1.bf16.msra.mxu0 0
    %173 = vmatprep.subr.bf16.mxu0 0
    %174 = vmatpush1.bf16.msra.mxu0 0
    %175 = vmatprep.subr.bf16.mxu0 0
    %176 = vmatpush1.bf16.msra.mxu0 0
    %177 = vmatprep.subr.bf16.mxu0 0
    %178 = vmatpush1.bf16.msra.mxu0 0
    %179 = vmatprep.subr.bf16.mxu0 0
    %180 = vmatpush1.bf16.msra.mxu0 0
    %181 = vmatprep.subr.bf16.mxu0 0
    %182 = vmatpush1.bf16.msra.mxu0 0
    %183 = vmatprep.subr.bf16.mxu0 0
    %184 = vmatpush1.bf16.msra.mxu0 0
    %185 = vmatprep.subr.bf16.mxu0 0
    %186 = vmatpush1.bf16.msra.mxu0 0
    %187 = vmatprep.subr.bf16.mxu0 0
    %188 = vmatpush1.bf16.msra.mxu0 0
    %189 = vmatprep.subr.bf16.mxu0 0
    %190 = vmatpush1.bf16.msra.mxu0 0
    %191 = vmatprep.subr.bf16.mxu0 0
    %192 = vmatpush1.bf16.msra.mxu0 0
    %193 = vmatprep.mubr.bf16.mxu0 0
    %194 = vmatmul.mubr.bf16.gmra.mrb[0].mxu0 %v159
    %v195 = vpop.f32.mrb[0].mxu0
    %v196 = vadd.f32 %v145, %v195
    %v197 = vpop.f32.mrb[0].mxu0
    %v198 = vpop.f32.mrb[0].mxu0
    %v199 = vadd.f32 %v150, %v198
    %v200 = vpop.f32.mrb[0].mxu0
    %201 = vdwg.mxu0
    %v202 = vadd.f32 %v196, %v116
    %v203 = vadd.f32 %v199, %v119
    %vm204 = vcmp.ge.f32.partialorder %v202, 0.0
    %vm205 = vcmp.ge.f32.partialorder %v203, 0.0
    %v206 = vstv %s39
    %v207 = vmul.f32 %v206, %v202
    %v208 = vmul.f32 %v206, %v203
    %v209 = vsel %vm204, %v202, %v207
    %v210 = vsel %vm205, %v203, %v208
    %s211 = scalar_lea.vmem %s1, 8
    %v212 = vld [vmem:[%s211] sm:$0xff]
    %v213 = vpack.c.bf16 %v212, %v212
    %v215 = vsel %vm69, %v213, 0
    %217 = vmatprep.subr.bf16.mxu0 0
    %218 = vmatpush1.bf16.msra.mxu0 %v215
    %219 = vmatprep.subr.bf16.mxu0 0
    %220 = vmatpush1.bf16.msra.mxu0 0
    %221 = vmatprep.subr.bf16.mxu0 0
    %222 = vmatpush1.bf16.msra.mxu0 0
    %223 = vmatprep.subr.bf16.mxu0 0
    %224 = vmatpush1.bf16.msra.mxu0 0
    %225 = vmatprep.subr.bf16.mxu0 0
    %226 = vmatpush1.bf16.msra.mxu0 0
    %227 = vmatprep.subr.bf16.mxu0 0
    %228 = vmatpush1.bf16.msra.mxu0 0
    %229 = vmatprep.subr.bf16.mxu0 0
    %230 = vmatpush1.bf16.msra.mxu0 0
    %231 = vmatprep.subr.bf16.mxu0 0
    %232 = vmatpush1.bf16.msra.mxu0 0
    %233 = vmatprep.subr.bf16.mxu0 0
    %234 = vmatpush1.bf16.msra.mxu0 0
    %235 = vmatprep.subr.bf16.mxu0 0
    %236 = vmatpush1.bf16.msra.mxu0 0
    %237 = vmatprep.subr.bf16.mxu0 0
    %238 = vmatpush1.bf16.msra.mxu0 0
    %239 = vmatprep.subr.bf16.mxu0 0
    %240 = vmatpush1.bf16.msra.mxu0 0
    %241 = vmatprep.subr.bf16.mxu0 0
    %242 = vmatpush1.bf16.msra.mxu0 0
    %243 = vmatprep.subr.bf16.mxu0 0
    %244 = vmatpush1.bf16.msra.mxu0 0
    %245 = vmatprep.subr.bf16.mxu0 0
    %246 = vmatpush1.bf16.msra.mxu0 0
    %247 = vmatprep.subr.bf16.mxu0 0
    %248 = vmatpush1.bf16.msra.mxu0 0
    %249 = vmatprep.mubr.bf16.mxu0 0
    %250 = vmatmul.mubr.bf16.gmra.mrb[0].mxu0 %v64
    %v251 = vpop.f32.mrb[0].mxu0
    %v252 = vadd.f32 0.0, %v251
    %v253 = vpop.f32.mrb[0].mxu0
    %v254 = vpop.f32.mrb[0].mxu0
    %v255 = vadd.f32 0.0, %v254
    %v256 = vpop.f32.mrb[0].mxu0
    %257 = vmatprep.mubr.bf16.mxu0 0
    %258 = vmatmul.mubr.bf16.gmra.mrb[0].mxu0 %v67
    %v259 = vpop.f32.mrb[0].mxu0
    %v260 = vadd.f32 0.0, %v259
    %v261 = vpop.f32.mrb[0].mxu0
    %v262 = vpop.f32.mrb[0].mxu0
    %v263 = vadd.f32 0.0, %v262
    %v264 = vpop.f32.mrb[0].mxu0
    %265 = vdwg.mxu0
    %v266 = vadd.f32 %v252, %v125
    %v267 = vadd.f32 %v255, %v130
    %vm268 = vcmp.ge.f32.partialorder %v266, 0.0
    %vm269 = vcmp.ge.f32.partialorder %v267, 0.0
    %v270 = vmul.f32 %v136, %v266
    %v271 = vmul.f32 %v136, %v267
    %v272 = vsel %vm268, %v266, %v270
    %v273 = vsel %vm269, %v267, %v271
    %v274 = vpack.c.bf16 %v273, %v272
    %275 = vmatprep.subr.bf16.mxu0 0
    %276 = vmatpush1.bf16.msra.mxu0 %v274
    %277 = vmatprep.subr.bf16.mxu0 0
    %278 = vmatpush1.bf16.msra.mxu0 0
    %279 = vmatprep.subr.bf16.mxu0 0
    %280 = vmatpush1.bf16.msra.mxu0 0
    %281 = vmatprep.subr.bf16.mxu0 0
    %282 = vmatpush1.bf16.msra.mxu0 0
    %283 = vmatprep.subr.bf16.mxu0 0
    %284 = vmatpush1.bf16.msra.mxu0 0
    %285 = vmatprep.subr.bf16.mxu0 0
    %286 = vmatpush1.bf16.msra.mxu0 0
    %287 = vmatprep.subr.bf16.mxu0 0
    %288 = vmatpush1.bf16.msra.mxu0 0
    %289 = vmatprep.subr.bf16.mxu0 0
    %290 = vmatpush1.bf16.msra.mxu0 0
    %291 = vmatprep.subr.bf16.mxu0 0
    %292 = vmatpush1.bf16.msra.mxu0 0
    %293 = vmatprep.subr.bf16.mxu0 0
    %294 = vmatpush1.bf16.msra.mxu0 0
    %295 = vmatprep.subr.bf16.mxu0 0
    %296 = vmatpush1.bf16.msra.mxu0 0
    %297 = vmatprep.subr.bf16.mxu0 0
    %298 = vmatpush1.bf16.msra.mxu0 0
    %299 = vmatprep.subr.bf16.mxu0 0
    %300 = vmatpush1.bf16.msra.mxu0 0
    %301 = vmatprep.subr.bf16.mxu0 0
    %302 = vmatpush1.bf16.msra.mxu0 0
    %303 = vmatprep.subr.bf16.mxu0 0
    %304 = vmatpush1.bf16.msra.mxu0 0
    %305 = vmatprep.subr.bf16.mxu0 0
    %306 = vmatpush1.bf16.msra.mxu0 0
    %307 = vmatprep.mubr.bf16.mxu0 0
    %308 = vmatmul.mubr.bf16.gmra.mrb[0].mxu0 %v159
    %v309 = vpop.f32.mrb[0].mxu0
    %v310 = vadd.f32 %v145, %v309
    %v311 = vpop.f32.mrb[0].mxu0
    %v312 = vpop.f32.mrb[0].mxu0
    %v313 = vadd.f32 %v150, %v312
    %v314 = vpop.f32.mrb[0].mxu0
    %315 = vdwg.mxu0
    %v316 = vadd.f32 %v310, %v260
    %v317 = vadd.f32 %v313, %v263
    %vm318 = vcmp.ge.f32.partialorder %v316, 0.0
    %vm319 = vcmp.ge.f32.partialorder %v317, 0.0
    %v320 = vmul.f32 %v206, %v316
    %v321 = vmul.f32 %v206, %v317
    %v322 = vsel %vm318, %v316, %v320
    %v323 = vsel %vm319, %v317, %v321
    %v324 = vmax.f32 %v209, %v322
    %v325 = vmax.f32 %v210, %v323
    %s326 = scalar_lea.vmem %s1, 16
    %v327 = vld [vmem:[%s326] sm:$0xff]
    %v328 = vpack.c.bf16 %v327, %v327
    %v330 = vsel %vm69, %v328, 0
    %332 = vmatprep.subr.bf16.mxu0 0
    %333 = vmatpush1.bf16.msra.mxu0 %v330
    %334 = vmatprep.subr.bf16.mxu0 0
    %335 = vmatpush1.bf16.msra.mxu0 0
    %336 = vmatprep.subr.bf16.mxu0 0
    %337 = vmatpush1.bf16.msra.mxu0 0
    %338 = vmatprep.subr.bf16.mxu0 0
    %339 = vmatpush1.bf16.msra.mxu0 0
    %340 = vmatprep.subr.bf16.mxu0 0
    %341 = vmatpush1.bf16.msra.mxu0 0
    %342 = vmatprep.subr.bf16.mxu0 0
    %343 = vmatpush1.bf16.msra.mxu0 0
    %344 = vmatprep.subr.bf16.mxu0 0
    %345 = vmatpush1.bf16.msra.mxu0 0
    %346 = vmatprep.subr.bf16.mxu0 0
    %347 = vmatpush1.bf16.msra.mxu0 0
    %348 = vmatprep.subr.bf16.mxu0 0
    %349 = vmatpush1.bf16.msra.mxu0 0
    %350 = vmatprep.subr.bf16.mxu0 0
    %351 = vmatpush1.bf16.msra.mxu0 0
    %352 = vmatprep.subr.bf16.mxu0 0
    %353 = vmatpush1.bf16.msra.mxu0 0
    %354 = vmatprep.subr.bf16.mxu0 0
    %355 = vmatpush1.bf16.msra.mxu0 0
    %356 = vmatprep.subr.bf16.mxu0 0
    %357 = vmatpush1.bf16.msra.mxu0 0
    %358 = vmatprep.subr.bf16.mxu0 0
    %359 = vmatpush1.bf16.msra.mxu0 0
    %360 = vmatprep.subr.bf16.mxu0 0
    %361 = vmatpush1.bf16.msra.mxu0 0
    %362 = vmatprep.subr.bf16.mxu0 0
    %363 = vmatpush1.bf16.msra.mxu0 0
    %364 = vmatprep.mubr.bf16.mxu0 0
    %365 = vmatmul.mubr.bf16.gmra.mrb[0].mxu0 %v64
    %v366 = vpop.f32.mrb[0].mxu0
    %v367 = vadd.f32 0.0, %v366
    %v368 = vpop.f32.mrb[0].mxu0
    %v369 = vpop.f32.mrb[0].mxu0
    %v370 = vadd.f32 0.0, %v369
    %v371 = vpop.f32.mrb[0].mxu0
    %372 = vmatprep.mubr.bf16.mxu0 0
    %373 = vmatmul.mubr.bf16.gmra.mrb[0].mxu0 %v67
    %v374 = vpop.f32.mrb[0].mxu0
    %v375 = vadd.f32 0.0, %v374
    %v376 = vpop.f32.mrb[0].mxu0
    %v377 = vpop.f32.mrb[0].mxu0
    %v378 = vadd.f32 0.0, %v377
    %v379 = vpop.f32.mrb[0].mxu0
    %380 = vdwg.mxu0
    %v381 = vadd.f32 %v367, %v125
    %v382 = vadd.f32 %v370, %v130
    %vm383 = vcmp.ge.f32.partialorder %v381, 0.0
    %vm384 = vcmp.ge.f32.partialorder %v382, 0.0
    %v385 = vmul.f32 %v136, %v381
    %v386 = vmul.f32 %v136, %v382
    %v387 = vsel %vm383, %v381, %v385
    %v388 = vsel %vm384, %v382, %v386
    %v389 = vpack.c.bf16 %v388, %v387
    %390 = vmatprep.subr.bf16.mxu0 0
    %391 = vmatpush1.bf16.msra.mxu0 %v389
    %392 = vmatprep.subr.bf16.mxu0 0
    %393 = vmatpush1.bf16.msra.mxu0 0
    %394 = vmatprep.subr.bf16.mxu0 0
    %395 = vmatpush1.bf16.msra.mxu0 0
    %396 = vmatprep.subr.bf16.mxu0 0
    %397 = vmatpush1.bf16.msra.mxu0 0
    %398 = vmatprep.subr.bf16.mxu0 0
    %399 = vmatpush1.bf16.msra.mxu0 0
    %400 = vmatprep.subr.bf16.mxu0 0
    %401 = vmatpush1.bf16.msra.mxu0 0
    %402 = vmatprep.subr.bf16.mxu0 0
    %403 = vmatpush1.bf16.msra.mxu0 0
    %404 = vmatprep.subr.bf16.mxu0 0
    %405 = vmatpush1.bf16.msra.mxu0 0
    %406 = vmatprep.subr.bf16.mxu0 0
    %407 = vmatpush1.bf16.msra.mxu0 0
    %408 = vmatprep.subr.bf16.mxu0 0
    %409 = vmatpush1.bf16.msra.mxu0 0
    %410 = vmatprep.subr.bf16.mxu0 0
    %411 = vmatpush1.bf16.msra.mxu0 0
    %412 = vmatprep.subr.bf16.mxu0 0
    %413 = vmatpush1.bf16.msra.mxu0 0
    %414 = vmatprep.subr.bf16.mxu0 0
    %415 = vmatpush1.bf16.msra.mxu0 0
    %416 = vmatprep.subr.bf16.mxu0 0
    %417 = vmatpush1.bf16.msra.mxu0 0
    %418 = vmatprep.subr.bf16.mxu0 0
    %419 = vmatpush1.bf16.msra.mxu0 0
    %420 = vmatprep.subr.bf16.mxu0 0
    %421 = vmatpush1.bf16.msra.mxu0 0
    %422 = vmatprep.mubr.bf16.mxu0 0
    %423 = vmatmul.mubr.bf16.gmra.mrb[0].mxu0 %v159
    %v424 = vpop.f32.mrb[0].mxu0
    %v425 = vadd.f32 %v145, %v424
    %v426 = vpop.f32.mrb[0].mxu0
    %v427 = vpop.f32.mrb[0].mxu0
    %v428 = vadd.f32 %v150, %v427
    %v429 = vpop.f32.mrb[0].mxu0
    %430 = vdwg.mxu0
    %v431 = vadd.f32 %v425, %v375
    %v432 = vadd.f32 %v428, %v378
    %vm433 = vcmp.ge.f32.partialorder %v431, 0.0
    %vm434 = vcmp.ge.f32.partialorder %v432, 0.0
    %v435 = vmul.f32 %v206, %v431
    %v436 = vmul.f32 %v206, %v432
    %v437 = vsel %vm433, %v431, %v435
    %v438 = vsel %vm434, %v432, %v436
    %v439 = vmax.f32 %v324, %v437
    %v440 = vmax.f32 %v325, %v438
    %vm441 = vcmask 523264
    %442 = vst.msk [vmem:[#allocation5] sm:$0xff] %vm441, %v439
    %443 = vst.msk [vmem:[#allocation5 + $0x8] sm:$0xff] %vm441, %v440
    // Predicated region
    $region30: #{tpu_custom_call.1} parent=1 // pred_check
      _
    $region31: #{tpu_custom_call.1} parent=1 // pred_check_branch
      %445 = sbr.rel (0) target = $region33
    $region32: #{tpu_custom_call.1} parent=1 // pred_region
      %s447 = ssub.s32 256, 256
      %448 = vsyncadd [#allocation3], %s447
      %s449 = sshll.u32 [#allocation5], 4
      %s450 = int_to_ptr.vmem [resolvable:$true] %s449
      %455 = dma.vmem_to_hbm [thread:$0]  %s450, 256, %s6, [#allocation3], 128, 128, 8
    $region33: #{tpu_custom_call.1} parent=1 // pred_fallthru
      _
    // Predicated region
    $region34: #{tpu_custom_call.1} parent=1 // pred_check
      _
    $region35: #{tpu_custom_call.1} parent=1 // pred_check_branch
      %457 = sbr.rel (0) target = $region37
    $region36: #{tpu_custom_call.1} parent=1 // pred_region
      %458 = dma.done [#allocation3], 256
    $region37: #{tpu_custom_call.1} parent=1 // pred_fallthru
      _
    %459 = vsyncpa [#allocation3], 1
    %460 = vsyncpa [#allocation4], 1

</llo_original>
